<compile_context>
chip_gen: v6e
topology: v6e:2x2x1
jax: 0.10.0
libtpu: 0.0.40
codegen_flags: <defaults>
</compile_context>

<pallas_src>
import functools

import jax
import jax.numpy as jnp
from jax.experimental import pallas as pl
from jax.experimental.pallas import tpu as pltpu

HIDDEN = 64          # logical hidden width (matches the PyTorch module)
HP = 128             # lane-padded hidden / output width


def _round_up(x, m):
    return ((x + m - 1) // m) * m


def qnetwork_kernel(x_ref, w1_ref, b1_ref, w2_ref, b2_ref, w3_ref, b3_ref,
                    out_ref):
    """Fused MLP forward on one batch tile: relu(relu(x@W1+b1)@W2+b2)@W3+b3.

    x tile arrives in f32 [TB, S] and is cast to bf16 in-kernel (free on the
    VPU, hidden under MXU/DMA).  Weights are bf16, lane-padded to 128; biases
    are f32 [1, 128].  All matmuls accumulate in f32 on the MXU; bias add and
    ReLU run in f32 on the VPU.  Output is stored as bf16 (lane-dense).
    """
    x = x_ref[...].astype(jnp.bfloat16)                        # in-kernel cast

    # fc1 + ReLU  (f32 accumulate, f32 elementwise)
    h1 = jnp.dot(x, w1_ref[...], preferred_element_type=jnp.float32)
    h1 = jnp.maximum(h1 + b1_ref[...], 0.0)

    # fc2 + ReLU
    h2 = jnp.dot(h1.astype(jnp.bfloat16), w2_ref[...],
                 preferred_element_type=jnp.float32)
    h2 = jnp.maximum(h2 + b2_ref[...], 0.0)

    # fc3 (no activation)
    q = jnp.dot(h2.astype(jnp.bfloat16), w3_ref[...],
                preferred_element_type=jnp.float32)
    out_ref[...] = (q + b3_ref[...]).astype(out_ref.dtype)


def init_qnetwork_params(key, state_size, action_size, hidden=HIDDEN):
    """Logical (unpadded) params, PyTorch-Linear-like uniform init.

    Weights are stored transposed relative to PyTorch ([in, out]) so the
    kernel can do plain x @ W.  Biases are [1, out] for clean broadcasting.
    """
    ks = jax.random.split(key, 6)

    def uniform(k, shape, fan_in):
        bound = 1.0 / jnp.sqrt(jnp.float32(fan_in))
        return jax.random.uniform(k, shape, jnp.float32, -bound, bound)

    return {
        "w1": uniform(ks[0], (state_size, hidden), state_size),
        "b1": uniform(ks[1], (1, hidden), state_size),
        "w2": uniform(ks[2], (hidden, hidden), hidden),
        "b2": uniform(ks[3], (1, hidden), hidden),
        "w3": uniform(ks[4], (hidden, action_size), hidden),
        "b3": uniform(ks[5], (1, action_size), hidden),
    }


def pad_params(params):
    """One-time prep: zero-pad feature axes to 128 lanes, cast weights to bf16.

    Padded columns/rows are exactly zero so they contribute nothing and the
    padded output lanes stay zero (relu(0 @ W + 0) = 0).
    """
    def pad_cols(a, width):
        return jnp.pad(a, ((0, 0), (0, width - a.shape[1])))

    def pad_rows(a, height):
        return jnp.pad(a, ((0, height - a.shape[0]), (0, 0)))

    w1 = pad_cols(params["w1"], HP)                       # [S, 128]
    w2 = pad_cols(pad_rows(params["w2"], HP), HP)         # [128, 128]
    w3 = pad_cols(pad_rows(params["w3"], HP), HP)         # [128, 128]
    return {
        "w1": w1.astype(jnp.bfloat16),
        "b1": pad_cols(params["b1"], HP).astype(jnp.float32),
        "w2": w2.astype(jnp.bfloat16),
        "b2": pad_cols(params["b2"], HP).astype(jnp.float32),
        "w3": w3.astype(jnp.bfloat16),
        "b3": pad_cols(params["b3"], HP).astype(jnp.float32),
    }


def _choose_tile(B, max_tile):
    """Batch tile (multiple of 16 for bf16 sublane packing) and padded batch.

    For small/medium batches split roughly in half so the grid has >=2 steps
    and the 'parallel' batch axis can be sharded across the 2 TensorCores on
    v7x.  For large batches use max_tile (default 2048) to amortize the fixed
    per-grid-step pipeline overhead; VMEM stays a few MiB even double-buffered
    (fits v5e's 16 MiB scoped default and v7x's 64 MiB physical VMEM).
    """
    if B <= max_tile:
        TB = max(16, _round_up(pl.cdiv(B, 2), 16))
    else:
        TB = max_tile
    Bp = _round_up(B, TB)
    return TB, Bp


@functools.partial(jax.jit, static_argnames=("action_size", "max_tile"))
def qnetwork_forward(x, padded_params, action_size, max_tile=2048):
    """x: [B, state_size] f32.  Returns [B, action_size] f32 Q-values."""
    B, S = x.shape
    TB, Bp = _choose_tile(B, max_tile)

    # No wrapper-side dtype cast (done in-kernel); pad only if B isn't a tile
    # multiple.  Padded tail rows compute garbage that is sliced off below.
    xp = x if Bp == B else jnp.pad(x, ((0, Bp - B), (0, 0)))

    p = padded_params
    flops = 2 * Bp * (S * HP + HP * HP + HP * HP)
    bytes_accessed = (Bp * S * 4 + Bp * HP * 2             # f32 x in, bf16 q out
                      + (S * HP + 2 * HP * HP) * 2         # bf16 weights
                      + 3 * HP * 4)                        # f32 biases

    out = pl.pallas_call(
        qnetwork_kernel,
        out_shape=jax.ShapeDtypeStruct((Bp, HP), jnp.bfloat16),
        grid_spec=pltpu.PrefetchScalarGridSpec(
            num_scalar_prefetch=0,
            grid=(Bp // TB,),
            in_specs=[
                pl.BlockSpec((TB, S), lambda i: (i, 0)),       # x tile (f32)
                pl.BlockSpec((S, HP), lambda i: (0, 0)),       # w1 (resident)
                pl.BlockSpec((1, HP), lambda i: (0, 0)),       # b1
                pl.BlockSpec((HP, HP), lambda i: (0, 0)),      # w2
                pl.BlockSpec((1, HP), lambda i: (0, 0)),       # b2
                pl.BlockSpec((HP, HP), lambda i: (0, 0)),      # w3
                pl.BlockSpec((1, HP), lambda i: (0, 0)),       # b3
            ],
            out_specs=pl.BlockSpec((TB, HP), lambda i: (i, 0)),
        ),
        compiler_params=pltpu.CompilerParams(
            dimension_semantics=("parallel",),
        ),
        cost_estimate=pl.CostEstimate(
            flops=flops, transcendentals=0, bytes_accessed=bytes_accessed),
    )(xp, p["w1"], p["b1"], p["w2"], p["b2"], p["w3"], p["b3"])

    # Tiny slice + cast back to f32 (output itself travels HBM as bf16).
    return out[:B, :action_size].astype(jnp.float32)


def qnetwork_reference(x, params):
    """Pure-JAX f32 reference mirroring the PyTorch forward."""
    h1 = jnp.maximum(x @ params["w1"] + params["b1"], 0.0)
    h2 = jnp.maximum(h1 @ params["w2"] + params["b2"], 0.0)
    return h2 @ params["w3"] + params["b3"]


if __name__ == "__main__":
    key = jax.random.PRNGKey(0)
    k_params, k_x1, k_x2 = jax.random.split(key, 3)

    state_size = 16
    action_size = 4

    params = init_qnetwork_params(k_params, state_size, action_size)
    padded = pad_params(params)

    # Case 1: tiny RL-style batch (single grid step).
    x1 = jax.random.normal(k_x1, (8, state_size), jnp.float32)
    q1 = jax.block_until_ready(qnetwork_forward(x1, padded, action_size))
    q1_ref = qnetwork_reference(x1, params)
    assert q1.shape == (8, action_size)
    assert jnp.allclose(q1, q1_ref, atol=2e-2, rtol=2e-2), "mismatch (B=8)"

    # Case 2: batch that exercises multi-step grid + tail-row padding.
    x2 = jax.random.normal(k_x2, (48, state_size), jnp.float32)
    q2 = jax.block_until_ready(qnetwork_forward(x2, padded, action_size))
    q2_ref = qnetwork_reference(x2, params)
    assert q2.shape == (48, action_size)
    assert jnp.allclose(q2, q2_ref, atol=2e-2, rtol=2e-2), "mismatch (B=48)"

    print("KERNEL_OK")
</pallas_src>

<mosaic_0001>
module attributes {stable_mosaic.version = 11 : i64} {
  func.func @qnetwork_kernel(%arg0: i32, %arg1: memref<16x16xf32, #tpu.memory_space<vmem>>, %arg2: memref<16x128xbf16, #tpu.memory_space<vmem>>, %arg3: memref<1x128xf32, #tpu.memory_space<vmem>>, %arg4: memref<128x128xbf16, #tpu.memory_space<vmem>>, %arg5: memref<1x128xf32, #tpu.memory_space<vmem>>, %arg6: memref<128x128xbf16, #tpu.memory_space<vmem>>, %arg7: memref<1x128xf32, #tpu.memory_space<vmem>>, %arg8: memref<16x128xbf16, #tpu.memory_space<vmem>>) attributes {dimension_semantics = [#tpu.dimension_semantics<parallel>], iteration_bounds = array<i64: 1>, scalar_prefetch = 0 : i64, scratch_operands = 0 : i64, tpu.core_type = #tpu.core_type<tc>, window_params = [{transform_indices = @transform_0, window_bounds = array<i64: 16, 16>}, {pipeline_mode = #tpu.pipeline_mode<synchronous>, transform_indices = @transform_1, window_bounds = array<i64: 16, 128>}, {pipeline_mode = #tpu.pipeline_mode<synchronous>, transform_indices = @transform_2, window_bounds = array<i64: 1, 128>}, {pipeline_mode = #tpu.pipeline_mode<synchronous>, transform_indices = @transform_3, window_bounds = array<i64: 128, 128>}, {pipeline_mode = #tpu.pipeline_mode<synchronous>, transform_indices = @transform_4, window_bounds = array<i64: 1, 128>}, {pipeline_mode = #tpu.pipeline_mode<synchronous>, transform_indices = @transform_5, window_bounds = array<i64: 128, 128>}, {pipeline_mode = #tpu.pipeline_mode<synchronous>, transform_indices = @transform_6, window_bounds = array<i64: 1, 128>}, {transform_indices = @transform_7, window_bounds = array<i64: 16, 128>}]} {
    %c0 = arith.constant 0 : index
    %c0_0 = arith.constant 0 : index
    %0 = vector.load %arg1[%c0, %c0_0] : memref<16x16xf32, #tpu.memory_space<vmem>>, vector<16x16xf32>
    %1 = arith.truncf %0 : vector<16x16xf32> to vector<16x16xbf16>
    %c0_1 = arith.constant 0 : index
    %c0_2 = arith.constant 0 : index
    %2 = vector.load %arg2[%c0_1, %c0_2] : memref<16x128xbf16, #tpu.memory_space<vmem>>, vector<16x128xbf16>
    %cst = arith.constant dense<0.000000e+00> : vector<16x128xf32>
    %3 = tpu.matmul %1, %2, %cst {dimension_numbers = #tpu.dot_dimension_numbers<[1], [0], [0], [1], [0, 0, 1, 1], [], []>} : vector<16x16xbf16>, vector<16x128xbf16>, vector<16x128xf32> -> vector<16x128xf32>
    %c0_3 = arith.constant 0 : index
    %c0_4 = arith.constant 0 : index
    %4 = vector.load %arg3[%c0_3, %c0_4] : memref<1x128xf32, #tpu.memory_space<vmem>>, vector<1x128xf32>
    %5 = vector.broadcast %4 : vector<1x128xf32> to vector<16x128xf32>
    %6 = arith.addf %3, %5 : vector<16x128xf32>
    %cst_5 = arith.constant 0.000000e+00 : f32
    %7 = vector.broadcast %cst_5 : f32 to vector<16x128xf32>
    %8 = arith.maximumf %6, %7 : vector<16x128xf32>
    %9 = arith.truncf %8 : vector<16x128xf32> to vector<16x128xbf16>
    %c0_6 = arith.constant 0 : index
    %c0_7 = arith.constant 0 : index
    %10 = vector.load %arg4[%c0_6, %c0_7] : memref<128x128xbf16, #tpu.memory_space<vmem>>, vector<128x128xbf16>
    %cst_8 = arith.constant dense<0.000000e+00> : vector<16x128xf32>
    %11 = tpu.matmul %9, %10, %cst_8 {dimension_numbers = #tpu.dot_dimension_numbers<[1], [0], [0], [1], [0, 0, 1, 1], [], []>} : vector<16x128xbf16>, vector<128x128xbf16>, vector<16x128xf32> -> vector<16x128xf32>
    %c0_9 = arith.constant 0 : index
    %c0_10 = arith.constant 0 : index
    %12 = vector.load %arg5[%c0_9, %c0_10] : memref<1x128xf32, #tpu.memory_space<vmem>>, vector<1x128xf32>
    %13 = vector.broadcast %12 : vector<1x128xf32> to vector<16x128xf32>
    %14 = arith.addf %11, %13 : vector<16x128xf32>
    %cst_11 = arith.constant 0.000000e+00 : f32
    %15 = vector.broadcast %cst_11 : f32 to vector<16x128xf32>
    %16 = arith.maximumf %14, %15 : vector<16x128xf32>
    %17 = arith.truncf %16 : vector<16x128xf32> to vector<16x128xbf16>
    %c0_12 = arith.constant 0 : index
    %c0_13 = arith.constant 0 : index
    %18 = vector.load %arg6[%c0_12, %c0_13] : memref<128x128xbf16, #tpu.memory_space<vmem>>, vector<128x128xbf16>
    %cst_14 = arith.constant dense<0.000000e+00> : vector<16x128xf32>
    %19 = tpu.matmul %17, %18, %cst_14 {dimension_numbers = #tpu.dot_dimension_numbers<[1], [0], [0], [1], [0, 0, 1, 1], [], []>} : vector<16x128xbf16>, vector<128x128xbf16>, vector<16x128xf32> -> vector<16x128xf32>
    %c0_15 = arith.constant 0 : index
    %c0_16 = arith.constant 0 : index
    %20 = vector.load %arg7[%c0_15, %c0_16] : memref<1x128xf32, #tpu.memory_space<vmem>>, vector<1x128xf32>
    %21 = vector.broadcast %20 : vector<1x128xf32> to vector<16x128xf32>
    %22 = arith.addf %19, %21 : vector<16x128xf32>
    %23 = arith.truncf %22 : vector<16x128xf32> to vector<16x128xbf16>
    %c0_17 = arith.constant 0 : index
    %c0_18 = arith.constant 0 : index
    %24 = vector.load %arg8[%c0_17, %c0_18] : memref<16x128xbf16, #tpu.memory_space<vmem>>, vector<16x128xbf16>
    tpu.vector_store %arg8[%c0_17, %c0_18], %23 {strides = array<i32>} : memref<16x128xbf16, #tpu.memory_space<vmem>>, vector<16x128xbf16>,
    return
  }
  func.func @transform_0(%arg0: i32) -> (i32, i32) {
    %c0_i32 = arith.constant 0 : i32
    %c0_i32_0 = arith.constant 0 : i32
    return %arg0, %c0_i32 : i32, i32
  }
  func.func @transform_1(%arg0: i32) -> (i32, i32) {
    %c0_i32 = arith.constant 0 : i32
    %c0_i32_0 = arith.constant 0 : i32
    %c0_i32_1 = arith.constant 0 : i32
    return %c0_i32, %c0_i32_0 : i32, i32
  }
  func.func @transform_2(%arg0: i32) -> (i32, i32) {
    %c0_i32 = arith.constant 0 : i32
    %c0_i32_0 = arith.constant 0 : i32
    %c0_i32_1 = arith.constant 0 : i32
    return %c0_i32, %c0_i32_0 : i32, i32
  }
  func.func @transform_3(%arg0: i32) -> (i32, i32) {
    %c0_i32 = arith.constant 0 : i32
    %c0_i32_0 = arith.constant 0 : i32
    %c0_i32_1 = arith.constant 0 : i32
    return %c0_i32, %c0_i32_0 : i32, i32
  }
  func.func @transform_4(%arg0: i32) -> (i32, i32) {
    %c0_i32 = arith.constant 0 : i32
    %c0_i32_0 = arith.constant 0 : i32
    %c0_i32_1 = arith.constant 0 : i32
    return %c0_i32, %c0_i32_0 : i32, i32
  }
  func.func @transform_5(%arg0: i32) -> (i32, i32) {
    %c0_i32 = arith.constant 0 : i32
    %c0_i32_0 = arith.constant 0 : i32
    %c0_i32_1 = arith.constant 0 : i32
    return %c0_i32, %c0_i32_0 : i32, i32
  }
  func.func @transform_6(%arg0: i32) -> (i32, i32) {
    %c0_i32 = arith.constant 0 : i32
    %c0_i32_0 = arith.constant 0 : i32
    %c0_i32_1 = arith.constant 0 : i32
    return %c0_i32, %c0_i32_0 : i32, i32
  }
  func.func @transform_7(%arg0: i32) -> (i32, i32) {
    %c0_i32 = arith.constant 0 : i32
    %c0_i32_0 = arith.constant 0 : i32
    return %arg0, %c0_i32 : i32, i32
  }
}

</mosaic_0001>

<llo_original>
// kernel: qnetwork_forward.1
$region0: #{qnetwork_forward.1}
  #allocation0 [shape = 'u32[]', space=smem, size = 0x4, offset = 0x4, fixed_abs, tag = 'smem constant byte address 0x4 - core index']
  #allocation1 [shape = 'u32[144,128]{1,0:T(1,128)}', space=vmem, size = 0x12000, scoped, tag = 'internal scratch']
  %s0 = inlined_call_operand.vmem [shape: f32[16,16], index: 0, kind: input, shape index: {}]
  %s1 = inlined_call_operand.vmem [shape: bf16[16,128], index: 1, kind: input, shape index: {}]
  %s2 = inlined_call_operand.vmem [shape: f32[1,128], index: 2, kind: input, shape index: {}]
  %s3 = inlined_call_operand.hbm [shape: bf16[128,128], index: 3, kind: input, shape index: {}]
  %s4 = inlined_call_operand.vmem [shape: f32[1,128], index: 4, kind: input, shape index: {}]
  %s5 = inlined_call_operand.hbm [shape: bf16[128,128], index: 5, kind: input, shape index: {}]
  %s6 = inlined_call_operand.vmem [shape: f32[1,128], index: 6, kind: input, shape index: {}]
  %s7 = inlined_call_operand.vmem [shape: bf16[16,128], index: 7, kind: output, shape index: {}]
  %s8 = sld [smem:[#allocation0]]
  $region46: #{qnetwork_forward.1} parent=0
    _
  %s10 = ssub.s32 1, %s8
  %s11 = scalar_select 0, %s10, %s8
  $region1: #{qnetwork_forward.1} parent=0
    #allocation2 [shape = 'u8[32768]{0}', space=vmem, size = 0x8000, scoped, tag = 'input window, operand 3, single buffered']
    #allocation3 [shape = 's32[1]{0}', space=sflag, size = 0x4, scoped, tag = 'scoped memory for qnetwork_forward.1']
    #allocation4 [shape = 'u8[32768]{0}', space=vmem, size = 0x8000, scoped, tag = 'input window, operand 5, single buffered']
    #allocation5 [shape = 's32[1]{0}', space=sflag, size = 0x4, scoped, tag = 'scoped memory for qnetwork_forward.1']
    %12 = vsyncpa [#allocation3], 0
    %13 = vsyncpa [#allocation5], 0
    // Predicated region
    $region2: #{qnetwork_forward.1} parent=1 // pred_check
      _
    $region3: #{qnetwork_forward.1} parent=1 // pred_check_branch
      %15 = sbr.rel (0) target = $region5
    $region4: #{qnetwork_forward.1} parent=1 // pred_region
      _
    $region5: #{qnetwork_forward.1} parent=1 // pred_fallthru
      _
    // Predicated region
    $region6: #{qnetwork_forward.1} parent=1 // pred_check
      _
    $region7: #{qnetwork_forward.1} parent=1 // pred_check_branch
      %17 = sbr.rel (0) target = $region9
    $region8: #{qnetwork_forward.1} parent=1 // pred_region
      _
    $region9: #{qnetwork_forward.1} parent=1 // pred_fallthru
      _
    // Predicated region
    $region10: #{qnetwork_forward.1} parent=1 // pred_check
      _
    $region11: #{qnetwork_forward.1} parent=1 // pred_check_branch
      %19 = sbr.rel (0) target = $region13
    $region12: #{qnetwork_forward.1} parent=1 // pred_region
      _
    $region13: #{qnetwork_forward.1} parent=1 // pred_fallthru
      _
    // Predicated region
    $region14: #{qnetwork_forward.1} parent=1 // pred_check
      _
    $region15: #{qnetwork_forward.1} parent=1 // pred_check_branch
      %21 = sbr.rel (0) target = $region17
    $region16: #{qnetwork_forward.1} parent=1 // pred_region
      %s23 = ssub.s32 1024, 1024
      %24 = vsyncadd [#allocation3], %s23
      %s25 = sshll.u32 [#allocation2], 4
      %s26 = int_to_ptr.vmem [resolvable:$true] %s25
      %31 = dma.hbm_to_vmem [thread:$0]  %s3, 1024, %s26, [#allocation3], 64, 64, 4
    $region17: #{qnetwork_forward.1} parent=1 // pred_fallthru
      _
    // Predicated region
    $region18: #{qnetwork_forward.1} parent=1 // pred_check
      _
    $region19: #{qnetwork_forward.1} parent=1 // pred_check_branch
      %33 = sbr.rel (0) target = $region21
    $region20: #{qnetwork_forward.1} parent=1 // pred_region
      _
    $region21: #{qnetwork_forward.1} parent=1 // pred_fallthru
      _
    // Predicated region
    $region22: #{qnetwork_forward.1} parent=1 // pred_check
      _
    $region23: #{qnetwork_forward.1} parent=1 // pred_check_branch
      %35 = sbr.rel (0) target = $region25
    $region24: #{qnetwork_forward.1} parent=1 // pred_region
      %s37 = ssub.s32 1024, 1024
      %38 = vsyncadd [#allocation5], %s37
      %s39 = sshll.u32 [#allocation4], 4
      %s40 = int_to_ptr.vmem [resolvable:$true] %s39
      %45 = dma.hbm_to_vmem [thread:$0]  %s5, 1024, %s40, [#allocation5], 64, 64, 4
    $region25: #{qnetwork_forward.1} parent=1 // pred_fallthru
      _
    // Predicated region
    $region26: #{qnetwork_forward.1} parent=1 // pred_check
      _
    $region27: #{qnetwork_forward.1} parent=1 // pred_check_branch
      %47 = sbr.rel (0) target = $region29
    $region28: #{qnetwork_forward.1} parent=1 // pred_region
      _
    $region29: #{qnetwork_forward.1} parent=1 // pred_fallthru
      _
    // Predicated region
    $region30: #{qnetwork_forward.1} parent=1 // pred_check
      _
    $region31: #{qnetwork_forward.1} parent=1 // pred_check_branch
      %49 = sbr.rel (0) target = $region33
    $region32: #{qnetwork_forward.1} parent=1 // pred_region
      %50 = dma.done [#allocation3], 1024
    $region33: #{qnetwork_forward.1} parent=1 // pred_fallthru
      _
    // Predicated region
    $region34: #{qnetwork_forward.1} parent=1 // pred_check
      _
    $region35: #{qnetwork_forward.1} parent=1 // pred_check_branch
      %52 = sbr.rel (0) target = $region37
    $region36: #{qnetwork_forward.1} parent=1 // pred_region
      %53 = dma.done [#allocation5], 1024
    $region37: #{qnetwork_forward.1} parent=1 // pred_fallthru
      _
    %v55 = vld [vmem:[%s0] sm:$0xff]
    %v56 = vld [vmem:[%s0 + $0x8] sm:$0xff]
    %v57 = vpack.c.bf16 %v56, %v55
    %v58 = vld [vmem:[%s1] sm:$0xf]
    %v59 = vld [vmem:[%s1 + $0x4] sm:$0xf]
    %v60 = vld [vmem:[%s2] sm:$0x1]
    %v62 = vlaneseq
    %v63 = vshrl.u32 %v62, 7
    %v64 = vsub.s32 0, %v63
    %v65 = vrot.slane %v60, %v64
    %v69 = vunpack.c.l.b16 %v58
    %v70 = vunpack.c.l.b16 %v59
    %v71 = vpack.c.b16 %v70, %v69
    %vm73 = vcmask 130048
    %v75 = vsel %vm73, %v57, 0
    %77 = vmatprep.subr.bf16.mxu0 0
    %78 = vmatpush1.bf16.msra.mxu0 0
    %79 = vmatprep.subr.bf16.mxu0 0
    %80 = vmatpush1.bf16.msra.mxu0 0
    %81 = vmatprep.subr.bf16.mxu0 0
    %82 = vmatpush1.bf16.msra.mxu0 0
    %83 = vmatprep.subr.bf16.mxu0 0
    %84 = vmatpush1.bf16.msra.mxu0 0
    %85 = vmatprep.subr.bf16.mxu0 0
    %86 = vmatpush1.bf16.msra.mxu0 0
    %87 = vmatprep.subr.bf16.mxu0 0
    %88 = vmatpush1.bf16.msra.mxu0 0
    %89 = vmatprep.subr.bf16.mxu0 0
    %90 = vmatpush1.bf16.msra.mxu0 0
    %91 = vmatprep.subr.bf16.mxu0 0
    %92 = vmatpush1.bf16.msra.mxu0 %v71
    %93 = vmatprep.subr.bf16.mxu0 0
    %94 = vmatpush2.bf16.msra.mxu0 0
    %95 = vmatprep.subr.bf16.mxu0 0
    %96 = vmatpush2.bf16.msra.mxu0 0
    %97 = vmatprep.subr.bf16.mxu0 0
    %98 = vmatpush2.bf16.msra.mxu0 0
    %99 = vmatprep.subr.bf16.mxu0 0
    %100 = vmatpush2.bf16.msra.mxu0 0
    %101 = vmatprep.subr.bf16.mxu0 0
    %102 = vmatpush2.bf16.msra.mxu0 0
    %103 = vmatprep.subr.bf16.mxu0 0
    %104 = vmatpush2.bf16.msra.mxu0 0
    %105 = vmatprep.subr.bf16.mxu0 0
    %106 = vmatpush2.bf16.msra.mxu0 0
    %107 = vmatprep.subr.bf16.mxu0 0
    %108 = vmatpush2.bf16.msra.mxu0 0
    %109 = vmatprep.mubr.bf16.mxu0 0
    %110 = vmatmul.mubr.bf16.gmra.mxu0 %v75
    %v111 = vpop.f32.mrf.mxu0
    %v112 = vadd.f32 %v65, %v111
    %v113 = vpop.f32.mrf.mxu0
    %v114 = vpop.f32.mrf.mxu0
    %v115 = vadd.f32 %v65, %v114
    %v116 = vpop.f32.mrf.mxu0
    %117 = vdwg.mxu0
    %v118 = vmax.f32 %v112, 0.0
    %v119 = vmax.f32 %v115, 0.0
    %v120 = vpack.c.bf16 %v119, %v118
    %v121 = vld [vmem:[#allocation2] sm:$0xf]
    %v122 = vld [vmem:[#allocation2 + $0x4] sm:$0xf]
    %v123 = vld [vmem:[#allocation2 + $0x8] sm:$0xf]
    %v124 = vld [vmem:[#allocation2 + $0xc] sm:$0xf]
    %v125 = vld [vmem:[#allocation2 + $0x10] sm:$0xf]
    %v126 = vld [vmem:[#allocation2 + $0x14] sm:$0xf]
    %v127 = vld [vmem:[#allocation2 + $0x18] sm:$0xf]
    %v128 = vld [vmem:[#allocation2 + $0x1c] sm:$0xf]
    %v129 = vld [vmem:[#allocation2 + $0x20] sm:$0xf]
    %v130 = vld [vmem:[#allocation2 + $0x24] sm:$0xf]
    %v131 = vld [vmem:[#allocation2 + $0x28] sm:$0xf]
    %v132 = vld [vmem:[#allocation2 + $0x2c] sm:$0xf]
    %v133 = vld [vmem:[#allocation2 + $0x30] sm:$0xf]
    %v134 = vld [vmem:[#allocation2 + $0x34] sm:$0xf]
    %v135 = vld [vmem:[#allocation2 + $0x38] sm:$0xf]
    %v136 = vld [vmem:[#allocation2 + $0x3c] sm:$0xf]
    %v137 = vld [vmem:[%s4] sm:$0x1]
    %v139 = vlaneseq
    %v140 = vshrl.u32 %v139, 7
    %v141 = vsub.s32 0, %v140
    %v142 = vrot.slane %v137, %v141
    %v160 = vunpack.c.l.b16 %v121
    %v161 = vunpack.c.l.b16 %v122
    %v162 = vunpack.c.l.b16 %v123
    %v163 = vunpack.c.l.b16 %v124
    %v164 = vunpack.c.l.b16 %v125
    %v165 = vunpack.c.l.b16 %v126
    %v166 = vunpack.c.l.b16 %v127
    %v167 = vunpack.c.l.b16 %v128
    %v168 = vunpack.c.l.b16 %v129
    %v169 = vunpack.c.l.b16 %v130
    %v170 = vunpack.c.l.b16 %v131
    %v171 = vunpack.c.l.b16 %v132
    %v172 = vunpack.c.l.b16 %v133
    %v173 = vunpack.c.l.b16 %v134
    %v174 = vunpack.c.l.b16 %v135
    %v175 = vunpack.c.l.b16 %v136
    %v176 = vpack.c.b16 %v161, %v160
    %v177 = vpack.c.b16 %v163, %v162
    %v178 = vpack.c.b16 %v165, %v164
    %v179 = vpack.c.b16 %v167, %v166
    %v180 = vpack.c.b16 %v169, %v168
    %v181 = vpack.c.b16 %v171, %v170
    %v182 = vpack.c.b16 %v173, %v172
    %v183 = vpack.c.b16 %v175, %v174
    %192 = vmatprep.subr.bf16.mxu0 0
    %193 = vmatpush1.bf16.msra.mxu0 %v183
    %194 = vmatprep.subr.bf16.mxu0 0
    %195 = vmatpush1.bf16.msra.mxu0 %v182
    %196 = vmatprep.subr.bf16.mxu0 0
    %197 = vmatpush1.bf16.msra.mxu0 %v181
    %198 = vmatprep.subr.bf16.mxu0 0
    %199 = vmatpush1.bf16.msra.mxu0 %v180
    %200 = vmatprep.subr.bf16.mxu0 0
    %201 = vmatpush1.bf16.msra.mxu0 %v179
    %202 = vmatprep.subr.bf16.mxu0 0
    %203 = vmatpush1.bf16.msra.mxu0 %v178
    %204 = vmatprep.subr.bf16.mxu0 0
    %205 = vmatpush1.bf16.msra.mxu0 %v177
    %206 = vmatprep.subr.bf16.mxu0 0
    %207 = vmatpush1.bf16.msra.mxu0 %v176
    %208 = vmatprep.subr.bf16.mxu0 0
    %209 = vmatpush2.bf16.msra.mxu0 0
    %210 = vmatprep.subr.bf16.mxu0 0
    %211 = vmatpush2.bf16.msra.mxu0 0
    %212 = vmatprep.subr.bf16.mxu0 0
    %213 = vmatpush2.bf16.msra.mxu0 0
    %214 = vmatprep.subr.bf16.mxu0 0
    %215 = vmatpush2.bf16.msra.mxu0 0
    %216 = vmatprep.subr.bf16.mxu0 0
    %217 = vmatpush2.bf16.msra.mxu0 0
    %218 = vmatprep.subr.bf16.mxu0 0
    %219 = vmatpush2.bf16.msra.mxu0 0
    %220 = vmatprep.subr.bf16.mxu0 0
    %221 = vmatpush2.bf16.msra.mxu0 0
    %222 = vmatprep.subr.bf16.mxu0 0
    %223 = vmatpush2.bf16.msra.mxu0 0
    %224 = vmatprep.mubr.bf16.mxu0 0
    %225 = vmatmul.mubr.bf16.gmra.mxu0 %v120
    %v226 = vpop.f32.mrf.mxu0
    %v227 = vadd.f32 %v142, %v226
    %v228 = vpop.f32.mrf.mxu0
    %v229 = vpop.f32.mrf.mxu0
    %v230 = vadd.f32 %v142, %v229
    %v231 = vpop.f32.mrf.mxu0
    %232 = vdwg.mxu0
    %v233 = vmax.f32 %v227, 0.0
    %v234 = vmax.f32 %v230, 0.0
    %v235 = vpack.c.bf16 %v234, %v233
    %v236 = vld [vmem:[#allocation4] sm:$0xf]
    %v237 = vld [vmem:[#allocation4 + $0x4] sm:$0xf]
    %v238 = vld [vmem:[#allocation4 + $0x8] sm:$0xf]
    %v239 = vld [vmem:[#allocation4 + $0xc] sm:$0xf]
    %v240 = vld [vmem:[#allocation4 + $0x10] sm:$0xf]
    %v241 = vld [vmem:[#allocation4 + $0x14] sm:$0xf]
    %v242 = vld [vmem:[#allocation4 + $0x18] sm:$0xf]
    %v243 = vld [vmem:[#allocation4 + $0x1c] sm:$0xf]
    %v244 = vld [vmem:[#allocation4 + $0x20] sm:$0xf]
    %v245 = vld [vmem:[#allocation4 + $0x24] sm:$0xf]
    %v246 = vld [vmem:[#allocation4 + $0x28] sm:$0xf]
    %v247 = vld [vmem:[#allocation4 + $0x2c] sm:$0xf]
    %v248 = vld [vmem:[#allocation4 + $0x30] sm:$0xf]
    %v249 = vld [vmem:[#allocation4 + $0x34] sm:$0xf]
    %v250 = vld [vmem:[#allocation4 + $0x38] sm:$0xf]
    %v251 = vld [vmem:[#allocation4 + $0x3c] sm:$0xf]
    %v252 = vld [vmem:[%s6] sm:$0x1]
    %v254 = vlaneseq
    %v255 = vshrl.u32 %v254, 7
    %v256 = vsub.s32 0, %v255
    %v257 = vrot.slane %v252, %v256
    %v275 = vunpack.c.l.b16 %v236
    %v276 = vunpack.c.l.b16 %v237
    %v277 = vunpack.c.l.b16 %v238
    %v278 = vunpack.c.l.b16 %v239
    %v279 = vunpack.c.l.b16 %v240
    %v280 = vunpack.c.l.b16 %v241
    %v281 = vunpack.c.l.b16 %v242
    %v282 = vunpack.c.l.b16 %v243
    %v283 = vunpack.c.l.b16 %v244
    %v284 = vunpack.c.l.b16 %v245
    %v285 = vunpack.c.l.b16 %v246
    %v286 = vunpack.c.l.b16 %v247
    %v287 = vunpack.c.l.b16 %v248
    %v288 = vunpack.c.l.b16 %v249
    %v289 = vunpack.c.l.b16 %v250
    %v290 = vunpack.c.l.b16 %v251
    %v291 = vpack.c.b16 %v276, %v275
    %v292 = vpack.c.b16 %v278, %v277
    %v293 = vpack.c.b16 %v280, %v279
    %v294 = vpack.c.b16 %v282, %v281
    %v295 = vpack.c.b16 %v284, %v283
    %v296 = vpack.c.b16 %v286, %v285
    %v297 = vpack.c.b16 %v288, %v287
    %v298 = vpack.c.b16 %v290, %v289
    %307 = vmatprep.subr.bf16.mxu0 0
    %308 = vmatpush1.bf16.msra.mxu0 %v298
    %309 = vmatprep.subr.bf16.mxu0 0
    %310 = vmatpush1.bf16.msra.mxu0 %v297
    %311 = vmatprep.subr.bf16.mxu0 0
    %312 = vmatpush1.bf16.msra.mxu0 %v296
    %313 = vmatprep.subr.bf16.mxu0 0
    %314 = vmatpush1.bf16.msra.mxu0 %v295
    %315 = vmatprep.subr.bf16.mxu0 0
    %316 = vmatpush1.bf16.msra.mxu0 %v294
    %317 = vmatprep.subr.bf16.mxu0 0
    %318 = vmatpush1.bf16.msra.mxu0 %v293
    %319 = vmatprep.subr.bf16.mxu0 0
    %320 = vmatpush1.bf16.msra.mxu0 %v292
    %321 = vmatprep.subr.bf16.mxu0 0
    %322 = vmatpush1.bf16.msra.mxu0 %v291
    %323 = vmatprep.subr.bf16.mxu0 0
    %324 = vmatpush2.bf16.msra.mxu0 0
    %325 = vmatprep.subr.bf16.mxu0 0
    %326 = vmatpush2.bf16.msra.mxu0 0
    %327 = vmatprep.subr.bf16.mxu0 0
    %328 = vmatpush2.bf16.msra.mxu0 0
    %329 = vmatprep.subr.bf16.mxu0 0
    %330 = vmatpush2.bf16.msra.mxu0 0
    %331 = vmatprep.subr.bf16.mxu0 0
    %332 = vmatpush2.bf16.msra.mxu0 0
    %333 = vmatprep.subr.bf16.mxu0 0
    %334 = vmatpush2.bf16.msra.mxu0 0
    %335 = vmatprep.subr.bf16.mxu0 0
    %336 = vmatpush2.bf16.msra.mxu0 0
    %337 = vmatprep.subr.bf16.mxu0 0
    %338 = vmatpush2.bf16.msra.mxu0 0
    %339 = vmatprep.mubr.bf16.mxu0 0
    %340 = vmatmul.mubr.bf16.gmra.mxu0 %v235
    %v341 = vpop.f32.mrf.mxu0
    %v342 = vadd.f32 %v257, %v341
    %v343 = vpop.f32.mrf.mxu0
    %v344 = vpop.f32.mrf.mxu0
    %v345 = vadd.f32 %v257, %v344
    %v346 = vpop.f32.mrf.mxu0
    %347 = vdwg.mxu0
    %v348 = vpack.c.bf16 %v345, %v342
    %v350 = vunpack.c.l.b16 %v348
    %v351 = vunpack.c.h.b16 %v348
    %v352 = vpack.c.b16 %v350, %v350
    %v353 = vpack.c.b16 %v351, %v351
    %356 = vst [vmem:[%s7] sm:$0xf] %v352
    %357 = vst [vmem:[%s7 + $0x4] sm:$0xf] %v353
    // Predicated region
    $region38: #{qnetwork_forward.1} parent=1 // pred_check
      _
    $region39: #{qnetwork_forward.1} parent=1 // pred_check_branch
      %359 = sbr.rel (0) target = $region41
    $region40: #{qnetwork_forward.1} parent=1 // pred_region
      _
    $region41: #{qnetwork_forward.1} parent=1 // pred_fallthru
      _
    // Predicated region
    $region42: #{qnetwork_forward.1} parent=1 // pred_check
      _
    $region43: #{qnetwork_forward.1} parent=1 // pred_check_branch
      %361 = sbr.rel (0) target = $region45
    $region44: #{qnetwork_forward.1} parent=1 // pred_region
      _
    $region45: #{qnetwork_forward.1} parent=1 // pred_fallthru
      _
    %362 = vsyncpa [#allocation3], 1
    %363 = vsyncpa [#allocation5], 1

</llo_original>
